<compile_context>
chip_gen: v6e
topology: v6e:2x2x1
jax: 0.10.0
libtpu: 0.0.40
codegen_flags: <defaults>
</compile_context>

<pallas_src>
import functools

import jax
import jax.numpy as jnp
from jax.experimental import pallas as pl
from jax.experimental.pallas import tpu as pltpu


def _round_up(x, m):
    return ((x + m - 1) // m) * m


def _focal_loss_kernel(*refs, gamma, batch, block_b, tiles_per_core, has_alpha):
    if has_alpha:
        logits_ref, labels_ref, alpha_ref, out_ref = refs
    else:
        logits_ref, labels_ref, out_ref = refs
        alpha_ref = None

    c = pl.program_id(0)   # core-split index ("parallel")
    i = pl.program_id(1)   # batch-tile index within this split ("arbitrary")

    # Per-core accumulator lives directly in the resident (1,128) output block.
    @pl.when(i == 0)
    def _init():
        out_ref[...] = jnp.zeros_like(out_ref)

    logits = logits_ref[...].astype(jnp.float32)       # [TB, C] (f32 for stable lse)
    labels = labels_ref[...]                           # [TB, 1] int32
    tb, num_classes = logits.shape

    # Numerically-stable per-row logsumexp.
    m = jnp.max(logits, axis=-1, keepdims=True)                              # [TB, 1]
    lse = jnp.log(jnp.sum(jnp.exp(logits - m), axis=-1, keepdims=True)) + m  # [TB, 1]

    # Target logit via lane-iota compare + where-select masked reduction
    # (no int->f32 one-hot cast, no full-width multiply).
    cls_ids = jax.lax.broadcasted_iota(jnp.int32, (tb, num_classes), dimension=1)
    hit = cls_ids == labels                                                  # [TB, C]
    logit_y = jnp.sum(jnp.where(hit, logits, 0.0), axis=-1, keepdims=True)   # [TB, 1]

    # Cheap [TB,1] epilogue.
    ce = lse - logit_y                                                       # [TB, 1]
    if has_alpha:
        ce = ce * alpha_ref[...]                       # per-row alpha[y], gathered in wrapper

    pt = jnp.exp(-ce)
    base = jnp.maximum(1.0 - pt, 0.0)   # clamp: ce can round an ulp negative -> pt > 1
    g = float(gamma)
    if g == 0.0:
        modulation = jnp.ones_like(ce)
    elif g.is_integer() and 1.0 <= g <= 8.0:
        # Small integer gamma: repeated VPU multiply instead of exp/log power.
        modulation = base
        for _ in range(int(g) - 1):
            modulation = modulation * base
    else:
        modulation = jnp.power(base, jnp.float32(g))
    focal = modulation * ce                                                  # [TB, 1]

    # Zero rows past the true batch (last partial tile, and fully-out-of-range tiles
    # that the index_map clamps on the unbalanced split). Select => NaN cannot leak.
    t = c * tiles_per_core + i
    row_ids = t * block_b + jax.lax.broadcasted_iota(jnp.int32, (tb, 1), dimension=0)
    focal = jnp.where(row_ids < batch, focal, 0.0)

    # Accumulate the per-tile partial sum ((1,1) broadcast across the 128-lane block).
    out_ref[...] += jnp.sum(focal, axis=0, keepdims=True)


def focal_loss(logits, labels, gamma=2.0, alpha=None, *,
               cast_to_bf16=False, vmem_limit_bytes=48 * 1024 * 1024):
    """logits: [B, C] float; labels: [B] int. Returns scalar float32 loss."""
    B, C = logits.shape
    has_alpha = alpha is not None

    if cast_to_bf16 and logits.dtype != jnp.bfloat16:
        # Optional HBM-bandwidth lever (esp. v5e): halves wire bytes; math stays f32.
        logits = logits.astype(jnp.bfloat16)
    itemsize = jnp.dtype(logits.dtype).itemsize

    # --- Byte-budget tile sizing (no arbitrary row cap) ------------------------------
    # Count: double-buffered logits stream, lane-padded (tb,1) label/alpha blocks
    # (each pads to 128 lanes of f32 per buffer), and ~3 f32 [tb,C] in-kernel temps.
    budget = int(vmem_limit_bytes * 0.75)            # headroom under the scoped limit
    per_row = 2 * C * itemsize                       # logits, 2 buffers
    per_row += 3 * C * 4                             # f32 intermediates
    per_row += 2 * 128 * 4                           # labels block, 2 buffers
    if has_alpha:
        per_row += 2 * 128 * 4                       # per-row alpha block, 2 buffers
    tb = max(8, (budget // per_row) // 8 * 8)
    # Keep at least 2 tiles when B allows it so the v7x core split has balanced work.
    tb = min(tb, _round_up(B, 8), _round_up(pl.cdiv(B, 2), 8))

    total_tiles = pl.cdiv(B, tb)
    num_splits = 2 if total_tiles >= 2 else 1        # v7x: one sweep per TensorCore
    tiles_per_core = pl.cdiv(total_tiles, num_splits)

    def tile_map(c, i):
        # Clamp so no block index is ever fully out of bounds; the kernel's row mask
        # (computed from the UNclamped index) zeroes any duplicated tile.
        t = jnp.minimum(c * tiles_per_core + i, total_tiles - 1)
        return (t, 0)

    labels_i32 = labels.astype(jnp.int32)
    labels_2d = labels_i32.reshape(B, 1)

    in_specs = [
        pl.BlockSpec((tb, C), tile_map),             # logits tile (streams over batch)
        pl.BlockSpec((tb, 1), tile_map),             # labels tile
    ]
    args = [logits, labels_2d]
    if has_alpha:
        # Gather alpha per row in the wrapper -> kernel does one [tb,1] multiply.
        alpha_vec = jnp.asarray(alpha, dtype=jnp.float32).reshape(C)
        alpha_row = jnp.take(alpha_vec, labels_i32, axis=0).reshape(B, 1)
        in_specs.append(pl.BlockSpec((tb, 1), tile_map))
        args.append(alpha_row)

    kernel = functools.partial(
        _focal_loss_kernel,
        gamma=float(gamma),
        batch=int(B),
        block_b=int(tb),
        tiles_per_core=int(tiles_per_core),
        has_alpha=has_alpha,
    )

    out = pl.pallas_call(
        kernel,
        # One lane-dense 128-wide partial per core split (satisfies (8,128) block rules
        # and keeps the final store unmasked).
        out_shape=jax.ShapeDtypeStruct((1, num_splits * 128), jnp.float32),
        grid=(num_splits, tiles_per_core),
        in_specs=in_specs,
        out_specs=pl.BlockSpec((1, 128), lambda c, i: (0, c)),
        compiler_params=pltpu.CompilerParams(
            dimension_semantics=("parallel", "arbitrary"),
            vmem_limit_bytes=int(vmem_limit_bytes),
        ),
    )(*args)

    partials = out[0, ::128]                          # lane 0 of each per-core block
    return jnp.sum(partials) * jnp.float32(1.0 / B)


if __name__ == "__main__":
    key = jax.random.PRNGKey(0)
    k_logits, k_labels, k_alpha, k_extra = jax.random.split(key, 4)

    # Pure-JAX reference (same math as the torch module).
    def ref_focal(lg, lb, gamma=2.0, alpha=None):
        lg = lg.astype(jnp.float32)
        logp = jax.nn.log_softmax(lg, axis=-1)
        nll = -logp[jnp.arange(lg.shape[0]), lb]
        if alpha is not None:
            nll = jnp.asarray(alpha, jnp.float32)[lb] * nll
        pt = jnp.exp(-nll)
        return jnp.mean((1.0 - pt) ** gamma * nll)

    B, C = 8, 32
    logits = jax.random.normal(k_logits, (B, C), dtype=jnp.float32)
    labels = jax.random.randint(k_labels, (B,), 0, C, dtype=jnp.int32)

    # Default module config: gamma=2.0, alpha=None.
    loss = focal_loss(logits, labels, gamma=2.0, alpha=None)
    jax.block_until_ready(loss)
    ref = ref_focal(logits, labels, gamma=2.0, alpha=None)
    assert jnp.allclose(loss, ref, rtol=1e-5, atol=1e-5), (loss, ref)

    # Per-class alpha weights path.
    alpha = jax.random.uniform(k_alpha, (C,), minval=0.5, maxval=1.5, dtype=jnp.float32)
    loss_a = focal_loss(logits, labels, gamma=2.0, alpha=alpha)
    jax.block_until_ready(loss_a)
    ref_a = ref_focal(logits, labels, gamma=2.0, alpha=alpha)
    assert jnp.allclose(loss_a, ref_a, rtol=1e-5, atol=1e-5), (loss_a, ref_a)

    # Ragged shapes: exercises the 2-way core split, last-tile row masking, lane-padded
    # class dim, and the non-integer-gamma power path.
    B2, C2 = 13, 37
    logits2 = jax.random.normal(k_extra, (B2, C2), dtype=jnp.float32)
    labels2 = jax.random.randint(k_labels, (B2,), 0, C2, dtype=jnp.int32)
    loss2 = focal_loss(logits2, labels2, gamma=1.5, alpha=None)
    jax.block_until_ready(loss2)
    ref2 = ref_focal(logits2, labels2, gamma=1.5, alpha=None)
    assert jnp.allclose(loss2, ref2, rtol=1e-4, atol=1e-5), (loss2, ref2)

    print("KERNEL_OK")
</pallas_src>

<mosaic_0001>
module attributes {stable_mosaic.version = 11 : i64} {
  func.func @_focal_loss_kernel(%arg0: i32, %arg1: i32, %arg2: memref<8x32xf32, #tpu.memory_space<vmem>>, %arg3: memref<8x1xi32, #tpu.memory_space<vmem>>, %arg4: memref<1x128xf32, #tpu.memory_space<vmem>>) attributes {dimension_semantics = [#tpu.dimension_semantics<parallel>, #tpu.dimension_semantics<arbitrary>], iteration_bounds = array<i64: 1, 1>, scalar_prefetch = 0 : i64, scratch_operands = 0 : i64, tpu.core_type = #tpu.core_type<tc>, window_params = [{transform_indices = @transform_0, window_bounds = array<i64: 8, 32>}, {transform_indices = @transform_1, window_bounds = array<i64: 8, 1>}, {transform_indices = @transform_2, window_bounds = array<i64: 1, 128>}]} {
    %c0_i32 = arith.constant 0 : i32
    %0 = arith.cmpi eq, %arg1, %c0_i32 : i32
    %1 = arith.extui %0 : i1 to i32
    %c0_i32_0 = arith.constant 0 : i32
    %2 = arith.cmpi ne, %1, %c0_i32_0 : i32
    scf.if %2 {
      %cst_17 = arith.constant 0.000000e+00 : f32
      %47 = vector.broadcast %cst_17 : f32 to vector<1x128xf32>
      %c0_18 = arith.constant 0 : index
      %c0_19 = arith.constant 0 : index
      %48 = vector.load %arg4[%c0_18, %c0_19] : memref<1x128xf32, #tpu.memory_space<vmem>>, vector<1x128xf32>
      tpu.vector_store %arg4[%c0_18, %c0_19], %47 {strides = array<i32>} : memref<1x128xf32, #tpu.memory_space<vmem>>, vector<1x128xf32>,
    } else {
    }
    %c0 = arith.constant 0 : index
    %c0_1 = arith.constant 0 : index
    %3 = vector.load %arg2[%c0, %c0_1] : memref<8x32xf32, #tpu.memory_space<vmem>>, vector<8x32xf32>
    %c0_2 = arith.constant 0 : index
    %c0_3 = arith.constant 0 : index
    %4 = vector.load %arg3[%c0_2, %c0_3] : memref<8x1xi32, #tpu.memory_space<vmem>>, vector<8x1xi32>
    %cst = arith.constant dense<0xFF800000> : vector<8xf32>
    %5 = vector.multi_reduction <maximumf>, %3, %cst [1] : vector<8x32xf32> to vector<8xf32>
    %6 = vector.shape_cast %5 : vector<8xf32> to vector<8x1xf32>
    %7 = vector.broadcast %6 : vector<8x1xf32> to vector<8x32xf32>
    %8 = arith.subf %3, %7 : vector<8x32xf32>
    %9 = math.exp %8 : vector<8x32xf32>
    %cst_4 = arith.constant dense<0.000000e+00> : vector<8xf32>
    %10 = vector.multi_reduction <add>, %9, %cst_4 [1] : vector<8x32xf32> to vector<8xf32>
    %11 = vector.shape_cast %10 : vector<8xf32> to vector<8x1xf32>
    %12 = math.log %11 : vector<8x1xf32>
    %13 = arith.addf %12, %6 : vector<8x1xf32>
    %14 = tpu.iota {dimensions = array<i32: 1>} : vector<8x32xi32>
    %15 = vector.broadcast %4 : vector<8x1xi32> to vector<8x32xi32>
    %16 = arith.cmpi eq, %14, %15 : vector<8x32xi32>
    %cst_5 = arith.constant 0.000000e+00 : f32
    %17 = vector.broadcast %cst_5 : f32 to vector<8x32xf32>
    %18 = arith.select %16, %3, %17 : vector<8x32xi1>, vector<8x32xf32>
    %cst_6 = arith.constant dense<0.000000e+00> : vector<8xf32>
    %19 = vector.multi_reduction <add>, %18, %cst_6 [1] : vector<8x32xf32> to vector<8xf32>
    %20 = vector.shape_cast %19 : vector<8xf32> to vector<8x1xf32>
    %21 = arith.subf %13, %20 : vector<8x1xf32>
    %cst_7 = arith.constant 0.000000e+00 : f32
    %22 = vector.broadcast %cst_7 : f32 to vector<8x1xf32>
    %23 = arith.subf %22, %21 : vector<8x1xf32>
    %24 = math.exp %23 : vector<8x1xf32>
    %cst_8 = arith.constant 1.000000e+00 : f32
    %25 = vector.broadcast %cst_8 : f32 to vector<8x1xf32>
    %26 = arith.subf %25, %24 : vector<8x1xf32>
    %cst_9 = arith.constant 0.000000e+00 : f32
    %27 = vector.broadcast %cst_9 : f32 to vector<8x1xf32>
    %28 = arith.maximumf %26, %27 : vector<8x1xf32>
    %29 = arith.mulf %28, %28 : vector<8x1xf32>
    %30 = arith.mulf %29, %21 : vector<8x1xf32>
    %c1_i32 = arith.constant 1 : i32
    %31 = arith.muli %arg0, %c1_i32 : i32
    %32 = arith.addi %31, %arg1 : i32
    %c8_i32 = arith.constant 8 : i32
    %33 = arith.muli %32, %c8_i32 : i32
    %34 = tpu.iota {dimensions = array<i32: 0>} : vector<8x1xi32>
    %35 = vector.broadcast %33 : i32 to vector<8x1xi32>
    %36 = arith.addi %35, %34 : vector<8x1xi32>
    %c8_i32_10 = arith.constant 8 : i32
    %37 = vector.broadcast %c8_i32_10 : i32 to vector<8x1xi32>
    %38 = arith.cmpi slt, %36, %37 : vector<8x1xi32>
    %cst_11 = arith.constant 0.000000e+00 : f32
    %39 = vector.broadcast %cst_11 : f32 to vector<8x1xf32>
    %40 = arith.select %38, %30, %39 : vector<8x1xi1>, vector<8x1xf32>
    %c0_12 = arith.constant 0 : index
    %c0_13 = arith.constant 0 : index
    %41 = vector.load %arg4[%c0_12, %c0_13] : memref<1x128xf32, #tpu.memory_space<vmem>>, vector<1x128xf32>
    %cst_14 = arith.constant dense<0.000000e+00> : vector<1xf32>
    %42 = vector.multi_reduction <add>, %40, %cst_14 [0] : vector<8x1xf32> to vector<1xf32>
    %43 = vector.shape_cast %42 : vector<1xf32> to vector<1x1xf32>
    %44 = vector.broadcast %43 : vector<1x1xf32> to vector<1x128xf32>
    %45 = arith.addf %41, %44 : vector<1x128xf32>
    %c0_15 = arith.constant 0 : index
    %c0_16 = arith.constant 0 : index
    %46 = vector.load %arg4[%c0_15, %c0_16] : memref<1x128xf32, #tpu.memory_space<vmem>>, vector<1x128xf32>
    tpu.vector_store %arg4[%c0_15, %c0_16], %45 {strides = array<i32>} : memref<1x128xf32, #tpu.memory_space<vmem>>, vector<1x128xf32>,
    return
  }
  func.func @transform_0(%arg0: i32, %arg1: i32) -> (i32, i32) {
    %c1_i32 = arith.constant 1 : i32
    %0 = arith.muli %arg0, %c1_i32 : i32
    %1 = arith.addi %0, %arg1 : i32
    %c0_i32 = arith.constant 0 : i32
    %2 = arith.minsi %1, %c0_i32 : i32
    %c0_i32_0 = arith.constant 0 : i32
    %c0_i32_1 = arith.constant 0 : i32
    return %2, %c0_i32_0 : i32, i32
  }
  func.func @transform_1(%arg0: i32, %arg1: i32) -> (i32, i32) {
    %c1_i32 = arith.constant 1 : i32
    %0 = arith.muli %arg0, %c1_i32 : i32
    %1 = arith.addi %0, %arg1 : i32
    %c0_i32 = arith.constant 0 : i32
    %2 = arith.minsi %1, %c0_i32 : i32
    %c0_i32_0 = arith.constant 0 : i32
    %c0_i32_1 = arith.constant 0 : i32
    return %2, %c0_i32_0 : i32, i32
  }
  func.func @transform_2(%arg0: i32, %arg1: i32) -> (i32, i32) {
    %c0_i32 = arith.constant 0 : i32
    %c0_i32_0 = arith.constant 0 : i32
    return %c0_i32, %arg0 : i32, i32
  }
}

</mosaic_0001>

<llo_original>
// kernel: tpu_custom_call.1
$region0: #{tpu_custom_call.1}
  #allocation0 [shape = 'u32[]', space=smem, size = 0x4, offset = 0x4, fixed_abs, tag = 'smem constant byte address 0x4 - core index']
  #allocation1 [shape = 'u32[144,128]{1,0:T(1,128)}', space=vmem, size = 0x12000, scoped, tag = 'internal scratch']
  %s0 = inlined_call_operand.vmem [shape: f32[8,32], index: 0, kind: input, shape index: {}]
  %s1 = inlined_call_operand.vmem [shape: s32[8,1], index: 1, kind: input, shape index: {}]
  %s2 = inlined_call_operand.hbm [shape: f32[1,128], index: 2, kind: output, shape index: {}]
  %s3 = sld [smem:[#allocation0]]
  $region22: #{tpu_custom_call.1} parent=0
    _
  %s5 = ssub.s32 1, %s3
  %s6 = scalar_select 0, %s5, %s3
  $region1: #{tpu_custom_call.1} parent=0
    #allocation2 [shape = 'u8[512]{0}', space=vmem, size = 0x400, scoped, tag = 'output window, operand 0, single buffered']
    #allocation3 [shape = 's32[1]{0}', space=sflag, size = 0x4, scoped, tag = 'scoped memory for tpu_custom_call.1']
    %7 = vsyncpa [#allocation3], 0
    // Predicated region
    $region2: #{tpu_custom_call.1} parent=1 // pred_check
      _
    $region3: #{tpu_custom_call.1} parent=1 // pred_check_branch
      %9 = sbr.rel (0) target = $region5
    $region4: #{tpu_custom_call.1} parent=1 // pred_region
      %s10 = sadd.s32 0, 0
      %p11 = scmp.lt.s32.totalorder %s10, 0
      %s12 = scalar_select %p11, %s10, 0
      %p13 = scmp.lt.s32.totalorder %s12, 0
      %s14 = scalar_select %p13, %s12, 0
      %s15 = smul.addr %s14, 8
      %s16 = scalar_lea.vmem %s0, %s15
      %s17 = sadd.s32 0, 0
      %p18 = scmp.lt.s32.totalorder %s17, 0
      %s19 = scalar_select %p18, %s17, 0
    $region5: #{tpu_custom_call.1} parent=1 // pred_fallthru
      _
    // Predicated region
    $region6: #{tpu_custom_call.1} parent=1 // pred_check
      _
    $region7: #{tpu_custom_call.1} parent=1 // pred_check_branch
      %21 = sbr.rel (0) target = $region9
    $region8: #{tpu_custom_call.1} parent=1 // pred_region
      %s22 = sadd.s32 0, 0
      %p23 = scmp.lt.s32.totalorder %s22, 0
      %s24 = scalar_select %p23, %s22, 0
      %p25 = scmp.lt.s32.totalorder %s24, 0
      %s26 = scalar_select %p25, %s24, 0
      %s27 = smul.addr %s26, 8
      %s28 = scalar_lea.vmem %s1, %s27
      %s29 = sadd.s32 0, 0
      %p30 = scmp.lt.s32.totalorder %s29, 0
      %s31 = scalar_select %p30, %s29, 0
    $region9: #{tpu_custom_call.1} parent=1 // pred_fallthru
      _
    %s32 = sadd.s32 0, 0
    %p33 = scmp.lt.s32.totalorder %s32, 0
    %s34 = scalar_select %p33, %s32, 0
    %p35 = scmp.lt.s32.totalorder %s34, 0
    %s36 = scalar_select %p35, %s34, 0
    %s37 = smul.addr %s36, 8
    %s38 = scalar_lea.vmem %s0, %s37
    %s39 = sadd.s32 0, 0
    %p40 = scmp.lt.s32.totalorder %s39, 0
    %s41 = scalar_select %p40, %s39, 0
    %p42 = scmp.lt.s32.totalorder %s41, 0
    %s43 = scalar_select %p42, %s41, 0
    %s44 = smul.addr %s43, 8
    %s45 = scalar_lea.vmem %s1, %s44
    %s46 = sadd.s32 0, 0
    %p47 = scmp.lt.s32.totalorder %s46, 0
    %s48 = scalar_select %p47, %s46, 0
    %p49 = scmp.lt.s32.totalorder %s48, 0
    %s50 = scalar_select %p49, %s48, 0
    %s51 = smul.addr %s50, 8
    %s52 = scalar_lea.vmem %s0, %s51
    %s53 = sadd.s32 0, 0
    %p54 = scmp.lt.s32.totalorder %s53, 0
    %s55 = scalar_select %p54, %s53, 0
    %s56 = sadd.s32 0, 0
    %p57 = scmp.lt.s32.totalorder %s56, 0
    %s58 = scalar_select %p57, %s56, 0
    %p59 = scmp.lt.s32.totalorder %s58, 0
    %s60 = scalar_select %p59, %s58, 0
    %s61 = smul.addr %s60, 8
    %s62 = scalar_lea.vmem %s1, %s61
    %s63 = sadd.s32 0, 0
    %p64 = scmp.lt.s32.totalorder %s63, 0
    %s65 = scalar_select %p64, %s63, 0
    %p66 = scmp.eq.s32.totalorder 0, 0
    // Predicated region
    $region10: #{tpu_custom_call.1} parent=1 // pred_check
      %p67 = pneg %p66
    $region11: #{tpu_custom_call.1} parent=1 // pred_check_branch
      %69 = sbr.rel (%p67) target = $region13
    $region12: #{tpu_custom_call.1} parent=1 // pred_region
      %70 = vst [vmem:[#allocation2] sm:$0x1] 0.0
    $region13: #{tpu_custom_call.1} parent=1 // pred_fallthru
      _
    %v71 = vld [vmem:[%s52] sm:$0xff]
    %v72 = vld [vmem:[%s62] sm:$0xff]
    %vm73 = vcmask 261120
    %v74 = vsel %vm73, %v71, -inf
    %75 = vmax.xlane.f32.xlu0 %v74
    %v76 = vpop.xlane.xlu0 %75
    %v77 = vsub.f32 %v71, %v76
    %v78 = vmul.f32 %v77, 1.442695
    %v79 = vpow.pop %v78
    %v80 = vsel %vm73, %v79, 0.0
    %81 = vadd.xlane.f32.xlu0 %v80
    %v82 = vpop.xlane.xlu0 %81
    %v83 = vlog2.pop %v82
    %v84 = vmul.f32 %v83, 0.6931472
    %v85 = vadd.f32 %v84, %v76
    %v86 = vlaneseq
    %v87 = vand.u32 %v86, 127
    %88 = vset.pattern.permute.xlu0 0
    %89 = vperm.xlu0 %88, %v72
    %v90 = vpop.permute.xlu0 %89
    %vm91 = vcmp.eq.s32.totalorder %v87, %v90
    %v92 = vsel %vm91, %v71, 0.0
    %v93 = vsel %vm73, %v92, 0.0
    %94 = vadd.xlane.f32.xlu0 %v93
    %v95 = vpop.xlane.xlu0 %94
    %v96 = vsub.f32 %v85, %v95
    %v97 = vsub.f32 0.0, %v96
    %v98 = vmul.f32 %v97, 1.442695
    %v99 = vpow.pop %v98
    %v100 = vsub.f32 1.0, %v99
    %v101 = vmax.f32 %v100, 0.0
    %v102 = vmul.f32 %v101, %v101
    %v103 = vmul.f32 %v102, %v96
    %s104 = sadd.s32 0, 0
    %s105 = smul.u32 %s104, 8
    %v106 = vlaneseq
    %v107 = vshrl.u32 %v106, 7
    %v108 = vstv %s105
    %v109 = vadd.s32 %v108, %v107
    %vm110 = vcmp.lt.s32.totalorder %v109, 8
    %v111 = vsel %vm110, %v103, 0.0
    %v112 = vld [vmem:[#allocation2] sm:$0x1]
    %v113 = vrot.slane %v111, 4
    %v114 = vadd.f32 %v111, %v113
    %v115 = vrot.slane %v114, 2
    %v116 = vadd.f32 %v114, %v115
    %v117 = vrot.slane %v116, 1
    %v118 = vadd.f32 %v116, %v117
    %v119 = vadd.f32 %v112, %v118
    %120 = vst [vmem:[#allocation2] sm:$0x1] %v119
    // Predicated region
    $region14: #{tpu_custom_call.1} parent=1 // pred_check
      _
    $region15: #{tpu_custom_call.1} parent=1 // pred_check_branch
      %122 = sbr.rel (0) target = $region17
    $region16: #{tpu_custom_call.1} parent=1 // pred_region
      %s124 = ssub.s32 16, 16
      %125 = vsyncadd [#allocation3], %s124
      %s127 = sshll.u32 [#allocation2], 4
      %s128 = int_to_ptr.vmem [resolvable:$true] %s127
      %130 = dma.vmem_to_hbm [thread:$0]  %s128, 16, %s2, [#allocation3]
    $region17: #{tpu_custom_call.1} parent=1 // pred_fallthru
      _
    // Predicated region
    $region18: #{tpu_custom_call.1} parent=1 // pred_check
      _
    $region19: #{tpu_custom_call.1} parent=1 // pred_check_branch
      %132 = sbr.rel (0) target = $region21
    $region20: #{tpu_custom_call.1} parent=1 // pred_region
      %133 = dma.done [#allocation3], 16
    $region21: #{tpu_custom_call.1} parent=1 // pred_fallthru
      _
    %134 = vsyncpa [#allocation3], 1

</llo_original>
